<compile_context>
chip_gen: v7x
topology: tpu7x:2x2x1
jax: 0.10.0
libtpu: 0.0.40
codegen_flags: <defaults>
</compile_context>

<pallas_src>
import math

import jax
import jax.numpy as jnp
from jax.experimental import pallas as pl
from jax.experimental.pallas import tpu as pltpu

KH = KW = 4
STRIDE = 2
PAD = 1

_VMEM_BUDGET_BYTES = 24 * 1024 * 1024   # per-step working-set target (fits v7x 64 MiB)
_VMEM_LIMIT_BYTES = 48 * 1024 * 1024    # explicit scoped VMEM, < physical on v5e/v6e/v7x


def _pick_tile_rows(Ho, Wo, per_row_bytes, budget_bytes, target_m=1024):
    """Output-row tile height TH.

    - TH divides Ho.
    - (TH*Wo) % 8 == 0 keeps the flattened (TH*Wo, Cout) output block
      sublane-aligned (relaxed vs. requiring Wo % 8 == 0; whole-image fallback
      only when no divisor aligns).
    - TH*Wo >= target_m output tokens per step when the VMEM budget allows
      (amortizes the ~0.35us per-grid-step overhead on the 128 MiB parts while
      still fitting v7x's 64 MiB).
    """
    divisors = [d for d in range(1, Ho + 1) if Ho % d == 0]
    aligned = [d for d in divisors if (d * Wo) % 8 == 0]
    pool = aligned if aligned else [Ho]
    fitting = [d for d in pool if d * per_row_bytes <= budget_bytes] or [pool[0]]
    for d in fitting:
        if d * Wo >= target_m:
            return d
    return fitting[-1]


def _make_kernel(TH, Wo):
    def kernel(xa_ref, xh_ref, w_ref, b_ref, o_ref):
        # xa_ref : (1, TH, Ws, C4)  s2d rows [i*TH, i*TH+TH)
        # xh_ref : (1, 1,  Ws, C4)  halo s2d row i*TH + TH
        # w_ref  : (4, C4, Cout)    folded taps, index = 2*row_off + col_off
        # b_ref  : (1, Cout)        f32 bias
        # o_ref  : (1, TH*Wo, Cout) output tokens of this tile
        C4 = xa_ref.shape[-1]
        Cout = o_ref.shape[-1]
        M = TH * Wo

        def col_taps(x3d, n_rows, w_base):
            # Two unit-stride column taps of the 2x2 (s2d-image) conv.
            m = n_rows * Wo
            t0 = x3d[:, 0:Wo, :].reshape(m, C4)        # col offset 0 (aligned)
            t1 = x3d[:, 1:1 + Wo, :].reshape(m, C4)    # col offset 1
            return (jnp.dot(t0, w_ref[w_base], preferred_element_type=jnp.float32)
                    + jnp.dot(t1, w_ref[w_base + 1], preferred_element_type=jnp.float32))

        x_a = xa_ref[0]                                # (TH, Ws, C4)
        x_h = xh_ref[0]                                # (1,  Ws, C4)

        # Row-offset-0 taps: all TH tile rows -> all M output rows.
        # f32 accumulator seeded with the bias (no separate epilogue add).
        acc = jnp.broadcast_to(b_ref[...].astype(jnp.float32), (M, Cout))
        acc = acc + col_taps(x_a, TH, 0)

        # Row-offset-1 taps for the LAST output row come from the halo row.
        last = col_taps(x_h, 1, 2)

        if TH > 1:
            # Row-offset-1 taps for output rows 0..TH-2 come from tile rows
            # 1..TH-1.  Leading-dim shift of x_a is free (no concatenate / no
            # tile-sized VMEM copy); results go to disjoint output row ranges.
            Mb = (TH - 1) * Wo
            hi = col_taps(x_a[1:], TH - 1, 2)
            o_ref[0, 0:Mb, :] = (acc[:Mb] + hi).astype(o_ref.dtype)
            o_ref[0, Mb:, :] = (acc[Mb:] + last).astype(o_ref.dtype)
        else:
            o_ref[0] = (acc + last).astype(o_ref.dtype)

    return kernel


def _downsample_impl(x, w_hwio, bias, *, compute_dtype=jnp.bfloat16):
    """x: (B, L, C_in) tokens; w_hwio: (4, 4, C_in, C_out); bias: (C_out,)."""
    B, L, Cin = x.shape
    H = int(round(math.sqrt(L)))
    assert H * H == L and H % STRIDE == 0, "token length must be an even perfect square"
    W = H
    Cout = w_hwio.shape[-1]
    Ho, Wo = H // STRIDE, W // STRIDE
    Hs, Ws = Ho + 1, Wo + 1
    C4 = 4 * Cin
    out_dtype = x.dtype
    cd = jnp.dtype(compute_dtype)

    # tokens -> padded NHWC -> space-to-depth(2x2) (+ cast): one fused XLA copy.
    x_nhwc = x.reshape(B, H, W, Cin)
    x_pad = jnp.pad(x_nhwc, ((0, 0), (PAD, PAD), (PAD, PAD), (0, 0)))
    x_s2d = (x_pad.reshape(B, Hs, 2, Ws, 2, Cin)
                  .transpose(0, 1, 3, 2, 4, 5)
                  .reshape(B, Hs, Ws, C4)
                  .astype(cd))

    # Fold taps: W[2a+u, 2b+v, c, o] -> w_fold[2a+b, u*2*Cin + v*Cin + c, o]
    w_fold = (w_hwio.reshape(2, 2, 2, 2, Cin, Cout)   # (a, u, b, v, c, o)
                    .transpose(0, 2, 1, 3, 4, 5)       # (a, b, u, v, c, o)
                    .reshape(4, C4, Cout)
                    .astype(cd))
    b2d = bias.reshape(1, Cout).astype(jnp.float32)

    # Tile height under an explicit VMEM budget (double buffers + temporaries).
    in_item = cd.itemsize
    out_item = jnp.dtype(out_dtype).itemsize
    fixed = (2 * 4 * C4 * Cout * in_item        # weights (double-buffered)
             + 2 * Ws * C4 * in_item            # halo row (double-buffered)
             + 2 * Cout * 4)                    # bias
    per_row = (2 * Ws * C4 * in_item            # bulk input rows (double-buffered)
               + 2 * Wo * Cout * out_item       # output rows (double-buffered)
               + Wo * Cout * 4                  # f32 accumulator
               + 2 * Wo * C4 * in_item)         # operand relayout temporaries
    TH = _pick_tile_rows(Ho, Wo, per_row, _VMEM_BUDGET_BYTES - fixed)
    RT = Ho // TH

    kernel = _make_kernel(TH, Wo)

    return pl.pallas_call(
        kernel,
        out_shape=jax.ShapeDtypeStruct((B, Ho * Wo, Cout), out_dtype),
        grid_spec=pltpu.PrefetchScalarGridSpec(
            num_scalar_prefetch=0,
            grid=(B, RT),
            in_specs=[
                # bulk rows of this tile
                pl.BlockSpec((1, TH, Ws, C4), lambda b, i: (b, i, 0, 0)),
                # one-row halo (row-block size 1 => block index == row index)
                pl.BlockSpec((1, 1, Ws, C4), lambda b, i: (b, (i + 1) * TH, 0, 0)),
                # weights / bias stay resident
                pl.BlockSpec((4, C4, Cout), lambda b, i: (0, 0, 0)),
                pl.BlockSpec((1, Cout), lambda b, i: (0, 0)),
            ],
            out_specs=pl.BlockSpec((1, TH * Wo, Cout), lambda b, i: (b, i, 0)),
        ),
        compiler_params=pltpu.CompilerParams(
            dimension_semantics=("parallel", "parallel"),
            vmem_limit_bytes=_VMEM_LIMIT_BYTES,
            # let XLA fuse the pad+s2d producer into the two image operands
            allow_input_fusion=[True, True, False, False],
        ),
    )(x_s2d, x_s2d, w_fold, b2d)


downsample = jax.jit(_downsample_impl, static_argnames=("compute_dtype",))


def _reference(x, w_hwio, bias):
    """Plain-JAX reference mirroring the PyTorch forward exactly."""
    B, L, Cin = x.shape
    H = W = int(math.sqrt(L))
    x_nchw = x.transpose(0, 2, 1).reshape(B, Cin, H, W)
    w_oihw = w_hwio.transpose(3, 2, 0, 1)  # (Cout, Cin, KH, KW)
    out = jax.lax.conv_general_dilated(
        x_nchw, w_oihw,
        window_strides=(STRIDE, STRIDE),
        padding=((PAD, PAD), (PAD, PAD)),
        dimension_numbers=("NCHW", "OIHW", "NCHW"),
    ) + bias[None, :, None, None]
    return out.reshape(out.shape[0], out.shape[1], -1).transpose(0, 2, 1)


if __name__ == "__main__":
    B, Cin, Cout, H = 2, 4, 8, 16
    L = H * H

    key = jax.random.PRNGKey(0)
    kx, kw, kb = jax.random.split(key, 3)

    x = jax.random.normal(kx, (B, L, Cin), dtype=jnp.float32)

    # Deterministic Conv2d-style init (kaiming-uniform-ish bounds).
    fan_in = Cin * KH * KW
    bound_w = math.sqrt(6.0 / fan_in)
    w_hwio = jax.random.uniform(kw, (KH, KW, Cin, Cout), jnp.float32,
                                minval=-bound_w, maxval=bound_w)
    bound_b = 1.0 / math.sqrt(fan_in)
    bias = jax.random.uniform(kb, (Cout,), jnp.float32,
                              minval=-bound_b, maxval=bound_b)

    ref = _reference(x, w_hwio, bias)

    # Exact-parity f32 path.
    out_f32 = jax.block_until_ready(downsample(x, w_hwio, bias,
                                               compute_dtype=jnp.float32))
    assert out_f32.shape == (B, (H // 2) * (H // 2), Cout), out_f32.shape
    assert jnp.allclose(out_f32, ref, atol=1e-4, rtol=1e-4), (
        float(jnp.max(jnp.abs(out_f32 - ref))))

    # Default fast path: bf16 operands, f32 accumulation.
    out_bf16 = jax.block_until_ready(downsample(x, w_hwio, bias))
    assert out_bf16.shape == (B, (H // 2) * (H // 2), Cout), out_bf16.shape
    assert jnp.allclose(out_bf16, ref, atol=1e-1, rtol=1e-1), (
        float(jnp.max(jnp.abs(out_bf16 - ref))))

    print("KERNEL_OK")
</pallas_src>

<mosaic_0001>
module attributes {stable_mosaic.version = 11 : i64} {
  func.func @kernel(%arg0: i32, %arg1: i32, %arg2: memref<1x8x9x16xf32, #tpu.memory_space<vmem>>, %arg3: memref<1x1x9x16xf32, #tpu.memory_space<vmem>>, %arg4: memref<4x16x8xf32, #tpu.memory_space<vmem>>, %arg5: memref<1x8xf32, #tpu.memory_space<vmem>>, %arg6: memref<1x64x8xf32, #tpu.memory_space<vmem>>) attributes {dimension_semantics = [#tpu.dimension_semantics<parallel>, #tpu.dimension_semantics<parallel>], iteration_bounds = array<i64: 2, 1>, scalar_prefetch = 0 : i64, scratch_operands = 0 : i64, tpu.core_type = #tpu.core_type<tc>, window_params = [{transform_indices = @transform_0, window_bounds = array<i64: 1, 8, 9, 16>}, {transform_indices = @transform_1, window_bounds = array<i64: 1, 1, 9, 16>}, {pipeline_mode = #tpu.pipeline_mode<synchronous>, transform_indices = @transform_2, window_bounds = array<i64: 4, 16, 8>}, {pipeline_mode = #tpu.pipeline_mode<synchronous>, transform_indices = @transform_3, window_bounds = array<i64: 1, 8>}, {transform_indices = @transform_4, window_bounds = array<i64: 1, 64, 8>}]} {
    %c0 = arith.constant 0 : index
    %c0_0 = arith.constant 0 : index
    %c0_1 = arith.constant 0 : index
    %c0_2 = arith.constant 0 : index
    %0 = vector.load %arg2[%c0, %c0_0, %c0_1, %c0_2] : memref<1x8x9x16xf32, #tpu.memory_space<vmem>>, vector<1x8x9x16xf32>
    %1 = vector.shape_cast %0 : vector<1x8x9x16xf32> to vector<8x9x16xf32>
    %c0_3 = arith.constant 0 : index
    %c0_4 = arith.constant 0 : index
    %c0_5 = arith.constant 0 : index
    %c0_6 = arith.constant 0 : index
    %2 = vector.load %arg3[%c0_3, %c0_4, %c0_5, %c0_6] : memref<1x1x9x16xf32, #tpu.memory_space<vmem>>, vector<1x1x9x16xf32>
    %3 = vector.shape_cast %2 : vector<1x1x9x16xf32> to vector<1x9x16xf32>
    %c0_7 = arith.constant 0 : index
    %c0_8 = arith.constant 0 : index
    %4 = vector.load %arg5[%c0_7, %c0_8] : memref<1x8xf32, #tpu.memory_space<vmem>>, vector<1x8xf32>
    %5 = vector.shape_cast %4 : vector<1x8xf32> to vector<1x8xf32>
    %6 = vector.broadcast %5 : vector<1x8xf32> to vector<64x8xf32>
    %7 = vector.extract_strided_slice %1 {offsets = [0, 0, 0], sizes = [8, 8, 16], strides = [1, 1, 1]} : vector<8x9x16xf32> to vector<8x8x16xf32>
    %8 = vector.shape_cast %7 : vector<8x8x16xf32> to vector<64x16xf32>
    %9 = vector.extract_strided_slice %1 {offsets = [0, 1, 0], sizes = [8, 8, 16], strides = [1, 1, 1]} : vector<8x9x16xf32> to vector<8x8x16xf32>
    %10 = vector.shape_cast %9 : vector<8x8x16xf32> to vector<64x16xf32>
    %c0_9 = arith.constant 0 : index
    %c0_10 = arith.constant 0 : index
    %c0_11 = arith.constant 0 : index
    %11 = vector.load %arg4[%c0_9, %c0_10, %c0_11] : memref<4x16x8xf32, #tpu.memory_space<vmem>>, vector<1x16x8xf32>
    %12 = vector.shape_cast %11 : vector<1x16x8xf32> to vector<16x8xf32>
    %cst = arith.constant dense<0.000000e+00> : vector<64x8xf32>
    %13 = tpu.matmul %8, %12, %cst {dimension_numbers = #tpu.dot_dimension_numbers<[1], [0], [0], [1], [0, 0, 1, 1], [], []>} : vector<64x16xf32>, vector<16x8xf32>, vector<64x8xf32> -> vector<64x8xf32>
    %c1 = arith.constant 1 : index
    %c0_12 = arith.constant 0 : index
    %c0_13 = arith.constant 0 : index
    %14 = vector.load %arg4[%c1, %c0_12, %c0_13] : memref<4x16x8xf32, #tpu.memory_space<vmem>>, vector<1x16x8xf32>
    %15 = vector.shape_cast %14 : vector<1x16x8xf32> to vector<16x8xf32>
    %cst_14 = arith.constant dense<0.000000e+00> : vector<64x8xf32>
    %16 = tpu.matmul %10, %15, %cst_14 {dimension_numbers = #tpu.dot_dimension_numbers<[1], [0], [0], [1], [0, 0, 1, 1], [], []>} : vector<64x16xf32>, vector<16x8xf32>, vector<64x8xf32> -> vector<64x8xf32>
    %17 = arith.addf %13, %16 : vector<64x8xf32>
    %18 = arith.addf %6, %17 : vector<64x8xf32>
    %19 = vector.extract_strided_slice %3 {offsets = [0, 0, 0], sizes = [1, 8, 16], strides = [1, 1, 1]} : vector<1x9x16xf32> to vector<1x8x16xf32>
    %20 = vector.shape_cast %19 : vector<1x8x16xf32> to vector<8x16xf32>
    %21 = vector.extract_strided_slice %3 {offsets = [0, 1, 0], sizes = [1, 8, 16], strides = [1, 1, 1]} : vector<1x9x16xf32> to vector<1x8x16xf32>
    %22 = vector.shape_cast %21 : vector<1x8x16xf32> to vector<8x16xf32>
    %c2 = arith.constant 2 : index
    %c0_15 = arith.constant 0 : index
    %c0_16 = arith.constant 0 : index
    %23 = vector.load %arg4[%c2, %c0_15, %c0_16] : memref<4x16x8xf32, #tpu.memory_space<vmem>>, vector<1x16x8xf32>
    %24 = vector.shape_cast %23 : vector<1x16x8xf32> to vector<16x8xf32>
    %cst_17 = arith.constant dense<0.000000e+00> : vector<8x8xf32>
    %25 = tpu.matmul %20, %24, %cst_17 {dimension_numbers = #tpu.dot_dimension_numbers<[1], [0], [0], [1], [0, 0, 1, 1], [], []>} : vector<8x16xf32>, vector<16x8xf32>, vector<8x8xf32> -> vector<8x8xf32>
    %c3 = arith.constant 3 : index
    %c0_18 = arith.constant 0 : index
    %c0_19 = arith.constant 0 : index
    %26 = vector.load %arg4[%c3, %c0_18, %c0_19] : memref<4x16x8xf32, #tpu.memory_space<vmem>>, vector<1x16x8xf32>
    %27 = vector.shape_cast %26 : vector<1x16x8xf32> to vector<16x8xf32>
    %cst_20 = arith.constant dense<0.000000e+00> : vector<8x8xf32>
    %28 = tpu.matmul %22, %27, %cst_20 {dimension_numbers = #tpu.dot_dimension_numbers<[1], [0], [0], [1], [0, 0, 1, 1], [], []>} : vector<8x16xf32>, vector<16x8xf32>, vector<8x8xf32> -> vector<8x8xf32>
    %29 = arith.addf %25, %28 : vector<8x8xf32>
    %30 = vector.extract_strided_slice %1 {offsets = [1, 0, 0], sizes = [7, 9, 16], strides = [1, 1, 1]} : vector<8x9x16xf32> to vector<7x9x16xf32>
    %31 = vector.extract_strided_slice %30 {offsets = [0, 0, 0], sizes = [7, 8, 16], strides = [1, 1, 1]} : vector<7x9x16xf32> to vector<7x8x16xf32>
    %32 = vector.shape_cast %31 : vector<7x8x16xf32> to vector<56x16xf32>
    %33 = vector.extract_strided_slice %30 {offsets = [0, 1, 0], sizes = [7, 8, 16], strides = [1, 1, 1]} : vector<7x9x16xf32> to vector<7x8x16xf32>
    %34 = vector.shape_cast %33 : vector<7x8x16xf32> to vector<56x16xf32>
    %c2_21 = arith.constant 2 : index
    %c0_22 = arith.constant 0 : index
    %c0_23 = arith.constant 0 : index
    %35 = vector.load %arg4[%c2_21, %c0_22, %c0_23] : memref<4x16x8xf32, #tpu.memory_space<vmem>>, vector<1x16x8xf32>
    %36 = vector.shape_cast %35 : vector<1x16x8xf32> to vector<16x8xf32>
    %cst_24 = arith.constant dense<0.000000e+00> : vector<56x8xf32>
    %37 = tpu.matmul %32, %36, %cst_24 {dimension_numbers = #tpu.dot_dimension_numbers<[1], [0], [0], [1], [0, 0, 1, 1], [], []>} : vector<56x16xf32>, vector<16x8xf32>, vector<56x8xf32> -> vector<56x8xf32>
    %c3_25 = arith.constant 3 : index
    %c0_26 = arith.constant 0 : index
    %c0_27 = arith.constant 0 : index
    %38 = vector.load %arg4[%c3_25, %c0_26, %c0_27] : memref<4x16x8xf32, #tpu.memory_space<vmem>>, vector<1x16x8xf32>
    %39 = vector.shape_cast %38 : vector<1x16x8xf32> to vector<16x8xf32>
    %cst_28 = arith.constant dense<0.000000e+00> : vector<56x8xf32>
    %40 = tpu.matmul %34, %39, %cst_28 {dimension_numbers = #tpu.dot_dimension_numbers<[1], [0], [0], [1], [0, 0, 1, 1], [], []>} : vector<56x16xf32>, vector<16x8xf32>, vector<56x8xf32> -> vector<56x8xf32>
    %41 = arith.addf %37, %40 : vector<56x8xf32>
    %42 = vector.extract_strided_slice %18 {offsets = [0, 0], sizes = [56, 8], strides = [1, 1]} : vector<64x8xf32> to vector<56x8xf32>
    %43 = arith.addf %42, %41 : vector<56x8xf32>
    %c0_29 = arith.constant 0 : index
    %c0_30 = arith.constant 0 : index
    %c0_31 = arith.constant 0 : index
    %44 = vector.load %arg6[%c0_29, %c0_30, %c0_31] : memref<1x64x8xf32, #tpu.memory_space<vmem>>, vector<1x56x8xf32>
    %45 = vector.shape_cast %44 : vector<1x56x8xf32> to vector<56x8xf32>
    %46 = vector.shape_cast %43 : vector<56x8xf32> to vector<1x56x8xf32>
    tpu.vector_store %arg6[%c0_29, %c0_30, %c0_31], %46 {strides = array<i32>} : memref<1x64x8xf32, #tpu.memory_space<vmem>>, vector<1x56x8xf32>,
    %47 = vector.extract_strided_slice %18 {offsets = [56, 0], sizes = [8, 8], strides = [1, 1]} : vector<64x8xf32> to vector<8x8xf32>
    %48 = arith.addf %47, %29 : vector<8x8xf32>
    %c0_32 = arith.constant 0 : index
    %c56 = arith.constant 56 : index
    %c0_33 = arith.constant 0 : index
    %49 = vector.load %arg6[%c0_32, %c56, %c0_33] : memref<1x64x8xf32, #tpu.memory_space<vmem>>, vector<1x8x8xf32>
    %50 = vector.shape_cast %49 : vector<1x8x8xf32> to vector<8x8xf32>
    %51 = vector.shape_cast %48 : vector<8x8xf32> to vector<1x8x8xf32>
    tpu.vector_store %arg6[%c0_32, %c56, %c0_33], %51 {strides = array<i32>} : memref<1x64x8xf32, #tpu.memory_space<vmem>>, vector<1x8x8xf32>,
    return
  }
  func.func @transform_0(%arg0: i32, %arg1: i32) -> (i32, i32, i32, i32) {
    %c0_i32 = arith.constant 0 : i32
    %c0_i32_0 = arith.constant 0 : i32
    %c0_i32_1 = arith.constant 0 : i32
    return %arg0, %arg1, %c0_i32, %c0_i32_0 : i32, i32, i32, i32
  }
  func.func @transform_1(%arg0: i32, %arg1: i32) -> (i32, i32, i32, i32) {
    %c1_i32 = arith.constant 1 : i32
    %0 = arith.addi %arg1, %c1_i32 : i32
    %c8_i32 = arith.constant 8 : i32
    %1 = arith.muli %0, %c8_i32 : i32
    %c0_i32 = arith.constant 0 : i32
    %c0_i32_0 = arith.constant 0 : i32
    %c0_i32_1 = arith.constant 0 : i32
    return %arg0, %1, %c0_i32, %c0_i32_0 : i32, i32, i32, i32
  }
  func.func @transform_2(%arg0: i32, %arg1: i32) -> (i32, i32, i32) {
    %c0_i32 = arith.constant 0 : i32
    %c0_i32_0 = arith.constant 0 : i32
    %c0_i32_1 = arith.constant 0 : i32
    %c0_i32_2 = arith.constant 0 : i32
    return %c0_i32, %c0_i32_0, %c0_i32_1 : i32, i32, i32
  }
  func.func @transform_3(%arg0: i32, %arg1: i32) -> (i32, i32) {
    %c0_i32 = arith.constant 0 : i32
    %c0_i32_0 = arith.constant 0 : i32
    %c0_i32_1 = arith.constant 0 : i32
    return %c0_i32, %c0_i32_0 : i32, i32
  }
  func.func @transform_4(%arg0: i32, %arg1: i32) -> (i32, i32, i32) {
    %c0_i32 = arith.constant 0 : i32
    %c0_i32_0 = arith.constant 0 : i32
    return %arg0, %arg1, %c0_i32 : i32, i32, i32
  }
}

</mosaic_0001>

<llo_original>
// kernel: _downsample_impl.1
$region0: #{_downsample_impl.1}
  #allocation0 [shape = 'u32[]', space=smem, size = 0x4, offset = 0x4, fixed_abs, tag = 'smem constant byte address 0x4 - core index']
  #allocation1 [shape = 'u32[144,128]{1,0:T(1,128)}', space=vmem, size = 0x12000, scoped, tag = 'internal scratch']
  %s0 = inlined_call_operand.vmem [shape: f32[2,9,9,16], index: 0, kind: input, shape index: {}, may-alias: {0,1}]
  %s1 = inlined_call_operand.vmem [shape: f32[2,9,9,16], index: 1, kind: input, shape index: {}, may-alias: {0,1}]
  %s2 = inlined_call_operand.vmem [shape: f32[4,16,8], index: 2, kind: input, shape index: {}]
  %s3 = inlined_call_operand.vmem [shape: f32[1,8], index: 3, kind: input, shape index: {}]
  %s4 = inlined_call_operand.vmem [shape: f32[2,64,8], index: 4, kind: output, shape index: {}]
  %s5 = sld [smem:[#allocation0]]
  $region49: #{_downsample_impl.1} parent=0
    _
  %s7 = ssub.s32 1, %s5
  %s8 = scalar_select 0, %s7, %s5
  loop: start=0, step=1, limit=4
  $region2: #{_downsample_impl.1} parent=0 // loop_pre_header
    _
  $region3: #{_downsample_impl.1} parent=0 // loop_header
    %s10 = sphi 0, %s14
    %p11 = scmp.ge.s32.totalorder %s10, 4
    %s17 = sphi 0, %s29
    %s18 = sphi 0, %s25
    %s19 = sphi 0, %s17
    %s20 = sphi 0, %s18
    %s21 = sphi 0, %s19
    %s22 = sphi 0, %s20
    %s34 = sphi 0, %s36
    %s37 = sphi 0, %s34
    %s38 = sphi 0, %s37
    %s54 = sphi 0, %s38
    %s66 = sphi 0, %s68
    %s69 = sphi 0, %s66
    %s70 = sphi 0, %s69
    %s86 = sphi 0, %s70
    %s90 = sphi 0, %s90
    %s92 = sphi 0, %s90
    %s93 = sphi 0, %s92
    %s107 = sphi 0, %s93
    %s111 = sphi 0, %s111
    %s113 = sphi 0, %s111
    %s114 = sphi 0, %s113
    %s128 = sphi 0, %s114
    %s136 = sphi 0, %s138
    %s139 = sphi 0, %s136
    %s140 = sphi 0, %s139
    %s156 = sphi 0, %s140
  $region4: #{_downsample_impl.1} parent=0 // loop_header_branch
    %13 = sbr.rel (%p11) target = $region8
  $region5: #{_downsample_impl.1} parent=0 // loop_body
    %s15 = ssub.s32 %s10, 1
    %s16 = ssub.s32 %s10, 2
    %s23 = sadd.s32 1, %s18
    %p24 = scmp.ge.s32.totalorder %s23, 1
    %s25 = scalar_select %p24, 0, %s23
    %s26 = sadd.s32 1, %s17
    %s27 = scalar_select %p24, %s26, %s17
    %p28 = scmp.ge.s32.totalorder %s27, 2
    %s29 = scalar_select %p28, 0, %s27
    %s30 = ssub.s32 %s17, %s29
    %s31 = ssub.s32 %s18, %s25
    %s32 = sor.u32 %s30, %s31
    %p33 = scmp.eq.s32.totalorder %s32, 0
    %s35 = sadd.s32 %s34, 1
    %s36 = scalar_select %p33, %s34, %s35
    %p39 = pneg %p33
    %p40 = scmp.eq.s32.totalorder %s10, 1
    %p41 = por %p39, %p40
    %p42 = scmp.ne.s32.totalorder %s34, %s37
    %p43 = scmp.eq.s32.totalorder %s10, 0
    %p44 = por %p42, %p43
    %p45 = scmp.ne.s32.totalorder %s34, %s37
    %p46 = scmp.eq.s32.totalorder %s15, 1
    %p47 = por %p45, %p46
    %p48 = scmp.ne.s32.totalorder %s37, %s38
    %p49 = scmp.eq.s32.totalorder %s15, 0
    %p50 = por %p48, %p49
    %p51 = scmp.ne.s32.totalorder %s37, %s38
    %p52 = scmp.eq.s32.totalorder %s16, 1
    %p53 = por %p51, %p52
    %p55 = scmp.ne.s32.totalorder %s38, %s54
    %p56 = scmp.eq.s32.totalorder %s16, 0
    %p57 = por %p55, %p56
    %s58 = sadd.s32 %s18, 1
    %s59 = smul.u32 %s58, 8
    %s60 = sadd.s32 %s25, 1
    %s61 = smul.u32 %s60, 8
    %s62 = ssub.s32 %s17, %s29
    %s63 = ssub.s32 %s59, %s61
    %s64 = sor.u32 %s62, %s63
    %p65 = scmp.eq.s32.totalorder %s64, 0
    %s67 = sadd.s32 %s66, 1
    %s68 = scalar_select %p65, %s66, %s67
    %p71 = pneg %p65
    %p72 = scmp.eq.s32.totalorder %s10, 1
    %p73 = por %p71, %p72
    %p74 = scmp.ne.s32.totalorder %s66, %s69
    %p75 = scmp.eq.s32.totalorder %s10, 0
    %p76 = por %p74, %p75
    %p77 = scmp.ne.s32.totalorder %s66, %s69
    %p78 = scmp.eq.s32.totalorder %s15, 1
    %p79 = por %p77, %p78
    %p80 = scmp.ne.s32.totalorder %s69, %s70
    %p81 = scmp.eq.s32.totalorder %s15, 0
    %p82 = por %p80, %p81
    %p83 = scmp.ne.s32.totalorder %s69, %s70
    %p84 = scmp.eq.s32.totalorder %s16, 1
    %p85 = por %p83, %p84
    %p87 = scmp.ne.s32.totalorder %s70, %s86
    %p88 = scmp.eq.s32.totalorder %s16, 0
    %p89 = por %p87, %p88
    %s91 = sadd.s32 %s90, 1
    %p94 = scmp.eq.s32.totalorder %s10, 1
    %p95 = scmp.ne.s32.totalorder %s90, %s92
    %p96 = scmp.eq.s32.totalorder %s10, 0
    %p97 = por %p95, %p96
    %p98 = scmp.ne.s32.totalorder %s90, %s92
    %p99 = scmp.eq.s32.totalorder %s15, 1
    %p100 = por %p98, %p99
    %p101 = scmp.ne.s32.totalorder %s92, %s93
    %p102 = scmp.eq.s32.totalorder %s15, 0
    %p103 = por %p101, %p102
    %p104 = scmp.ne.s32.totalorder %s92, %s93
    %p105 = scmp.eq.s32.totalorder %s16, 1
    %p106 = por %p104, %p105
    %p108 = scmp.ne.s32.totalorder %s93, %s107
    %p109 = scmp.eq.s32.totalorder %s16, 0
    %p110 = por %p108, %p109
    %s112 = sadd.s32 %s111, 1
    %p115 = scmp.eq.s32.totalorder %s10, 1
    %p116 = scmp.ne.s32.totalorder %s111, %s113
    %p117 = scmp.eq.s32.totalorder %s10, 0
    %p118 = por %p116, %p117
    %p119 = scmp.ne.s32.totalorder %s111, %s113
    %p120 = scmp.eq.s32.totalorder %s15, 1
    %p121 = por %p119, %p120
    %p122 = scmp.ne.s32.totalorder %s113, %s114
    %p123 = scmp.eq.s32.totalorder %s15, 0
    %p124 = por %p122, %p123
    %p125 = scmp.ne.s32.totalorder %s113, %s114
    %p126 = scmp.eq.s32.totalorder %s16, 1
    %p127 = por %p125, %p126
    %p129 = scmp.ne.s32.totalorder %s114, %s128
    %p130 = scmp.eq.s32.totalorder %s16, 0
    %p131 = por %p129, %p130
    %s132 = ssub.s32 %s17, %s29
    %s133 = ssub.s32 %s18, %s25
    %s134 = sor.u32 %s132, %s133
    %p135 = scmp.eq.s32.totalorder %s134, 0
    %s137 = sadd.s32 %s136, 1
    %s138 = scalar_select %p135, %s136, %s137
    %p141 = pneg %p135
    %p142 = scmp.eq.s32.totalorder %s10, 1
    %p143 = por %p141, %p142
    %p144 = scmp.ne.s32.totalorder %s136, %s139
    %p145 = scmp.eq.s32.totalorder %s10, 0
    %p146 = por %p144, %p145
    %p147 = scmp.ne.s32.totalorder %s136, %s139
    %p148 = scmp.eq.s32.totalorder %s15, 1
    %p149 = por %p147, %p148
    %p150 = scmp.ne.s32.totalorder %s139, %s140
    %p151 = scmp.eq.s32.totalorder %s15, 0
    %p152 = por %p150, %p151
    %p153 = scmp.ne.s32.totalorder %s139, %s140
    %p154 = scmp.eq.s32.totalorder %s16, 1
    %p155 = por %p153, %p154
    %p157 = scmp.ne.s32.totalorder %s140, %s156
    %p158 = scmp.eq.s32.totalorder %s16, 0
    %p159 = por %p157, %p158
    %p160 = scmp.le.s32.totalorder 1, %s10
    %p161 = scmp.lt.s32.totalorder %s10, 3
    %p162 = pnand %p160, %p161
    %p163 = pneg %p162
    // Predicated region
    $region9: #{_downsample_impl.1} parent=5 // pred_check
      _
    $region10: #{_downsample_impl.1} parent=5 // pred_check_branch
      %165 = sbr.rel (%p162) target = $region12
    $region11: #{_downsample_impl.1} parent=5 // pred_region
      %s166 = ssub.s32 %s10, 1
      // Predicated region
      $region13: #{_downsample_impl.1} parent=11 // pred_check
        %p167 = pneg %p103
      $region14: #{_downsample_impl.1} parent=11 // pred_check_branch
        %169 = sbr.rel (%p167) target = $region16
      $region15: #{_downsample_impl.1} parent=11 // pred_region
        _
      $region16: #{_downsample_impl.1} parent=11 // pred_fallthru
        _
      // Predicated region
      $region17: #{_downsample_impl.1} parent=11 // pred_check
        %p170 = pneg %p124
      $region18: #{_downsample_impl.1} parent=11 // pred_check_branch
        %172 = sbr.rel (%p170) target = $region20
      $region19: #{_downsample_impl.1} parent=11 // pred_region
        _
      $region20: #{_downsample_impl.1} parent=11 // pred_fallthru
        _
    $region12: #{_downsample_impl.1} parent=5 // pred_fallthru
      _
    %p173 = scmp.lt.s32.totalorder %s10, 2
    // Predicated region
    $region21: #{_downsample_impl.1} parent=5 // pred_check
      %p174 = pneg %p173
    $region22: #{_downsample_impl.1} parent=5 // pred_check_branch
      %176 = sbr.rel (%p174) target = $region24
    $region23: #{_downsample_impl.1} parent=5 // pred_region
      // Predicated region
      $region25: #{_downsample_impl.1} parent=23 // pred_check
        %p177 = pneg %p44
      $region26: #{_downsample_impl.1} parent=23 // pred_check_branch
        %179 = sbr.rel (%p177) target = $region28
      $region27: #{_downsample_impl.1} parent=23 // pred_region
        %s180 = smul.u32 8, %s18
        %s181 = ssub.s32 9, %s180
        %p182 = scmp.lt.s32.totalorder %s181, 8
        %s183 = scalar_select %p182, %s181, 8
        %s184 = smul.u32 128, %s183
        %s185 = smul.u32 %s184, 2
        %p186 = scmp.lt.s32.totalorder %s17, 1
        %s187 = scalar_select %p186, %s17, 1
        %p188 = scmp.lt.s32.totalorder %s180, 8
        %s189 = scalar_select %p188, %s180, 8
        %s190 = smul.addr %s189, 2
        %s191 = smul.addr %s187, 18
        %s192 = sadd.s32 %s190, %s191
        %s193 = smul.addr %s192, 8
        %s194 = scalar_lea.vmem %s0, %s193
        %s195 = smul.u32 8, %s18
        %s196 = ssub.s32 9, %s195
        %p197 = scmp.lt.s32.totalorder %s196, 8
        %s198 = scalar_select %p197, %s196, 8
        %s199 = smul.u32 128, %s198
        %s200 = smul.u32 %s199, 2
      $region28: #{_downsample_impl.1} parent=23 // pred_fallthru
        _
      // Predicated region
      $region29: #{_downsample_impl.1} parent=23 // pred_check
        %p201 = pneg %p76
      $region30: #{_downsample_impl.1} parent=23 // pred_check_branch
        %203 = sbr.rel (%p201) target = $region32
      $region31: #{_downsample_impl.1} parent=23 // pred_region
        %s204 = sadd.s32 %s18, 1
        %s205 = smul.u32 %s204, 8
        %p206 = scmp.lt.s32.totalorder %s17, 1
        %s207 = scalar_select %p206, %s17, 1
        %p208 = scmp.lt.s32.totalorder %s205, 8
        %s209 = scalar_select %p208, %s205, 8
        %s210 = smul.addr %s209, 2
        %s211 = smul.addr %s207, 18
        %s212 = sadd.s32 %s210, %s211
        %s213 = smul.addr %s212, 8
        %s214 = scalar_lea.vmem %s1, %s213
        %s215 = sadd.s32 %s18, 1
        %s216 = smul.u32 %s215, 8
      $region32: #{_downsample_impl.1} parent=23 // pred_fallthru
        _
    $region24: #{_downsample_impl.1} parent=5 // pred_fallthru
      _
    %p217 = scmp.le.s32.totalorder 1, %s10
    %p218 = scmp.lt.s32.totalorder %s10, 3
    %p219 = pnand %p217, %p218
    %p220 = pneg %p219
    // Predicated region
    $region33: #{_downsample_impl.1} parent=5 // pred_check
      _
    $region34: #{_downsample_impl.1} parent=5 // pred_check_branch
      %222 = sbr.rel (%p219) target = $region36
    $region35: #{_downsample_impl.1} parent=5 // pred_region
      %s223 = ssub.s32 %s10, 1
      %s224 = smul.u32 8, %s20
      %s225 = ssub.s32 9, %s224
      %p226 = scmp.lt.s32.totalorder %s225, 8
      %s227 = scalar_select %p226, %s225, 8
      %s228 = smul.u32 128, %s227
      %s229 = smul.u32 %s228, 2
      %p230 = scmp.lt.s32.totalorder %s19, 1
      %s231 = scalar_select %p230, %s19, 1
      %p232 = scmp.lt.s32.totalorder %s224, 8
      %s233 = scalar_select %p232, %s224, 8
      %s234 = smul.addr %s233, 2
      %s235 = smul.addr %s231, 18
      %s236 = sadd.s32 %s234, %s235
      %s237 = smul.addr %s236, 8
      %s238 = scalar_lea.vmem %s0, %s237
      %p239 = pneg %p50
      %p240 = pneg %p47
      %s241 = sadd.s32 %s20, 1
      %s242 = smul.u32 %s241, 8
      %p243 = scmp.lt.s32.totalorder %s19, 1
      %s244 = scalar_select %p243, %s19, 1
      %p245 = scmp.lt.s32.totalorder %s242, 8
      %s246 = scalar_select %p245, %s242, 8
      %s247 = smul.addr %s246, 2
      %s248 = smul.addr %s244, 18
      %s249 = sadd.s32 %s247, %s248
      %s250 = smul.addr %s249, 8
      %s251 = scalar_lea.vmem %s1, %s250
      %p252 = pneg %p82
      %p253 = pneg %p79
      %p254 = pneg %p103
      %p255 = pneg %p100
      %p256 = pneg %p124
      %p257 = pneg %p121
      %p258 = pneg %p152
      %p259 = pneg %p149
      %s260 = smul.u32 8, %s20
      %p261 = scmp.lt.s32.totalorder %s19, 1
      %s262 = scalar_select %p261, %s19, 1
      %p263 = scmp.lt.s32.totalorder %s260, 7
      %s264 = scalar_select %p263, %s260, 7
      %s265 = smul.addr %s262, 8
      %s266 = sadd.s32 %s264, %s265
      %s267 = smul.addr %s266, 8
      %s268 = scalar_lea.vmem %s4, %s267
      %s269 = smul.u32 8, %s20
      %s270 = ssub.s32 9, %s269
      %p271 = scmp.lt.s32.totalorder %s270, 8
      %s272 = scalar_select %p271, %s270, 8
      %s273 = smul.u32 128, %s272
      %s274 = smul.u32 %s273, 2
      %p275 = scmp.lt.s32.totalorder %s19, 1
      %s276 = scalar_select %p275, %s19, 1
      %p277 = scmp.lt.s32.totalorder %s269, 8
      %s278 = scalar_select %p277, %s269, 8
      %s279 = smul.addr %s278, 2
      %s280 = smul.addr %s276, 18
      %s281 = sadd.s32 %s279, %s280
      %s282 = smul.addr %s281, 8
      %s283 = scalar_lea.vmem %s0, %s282
      %s284 = smul.u32 8, %s20
      %s285 = ssub.s32 9, %s284
      %p286 = scmp.lt.s32.totalorder %s285, 8
      %s287 = scalar_select %p286, %s285, 8
      %s288 = smul.u32 128, %s287
      %s289 = smul.u32 %s288, 2
      %s290 = sadd.s32 %s20, 1
      %s291 = smul.u32 %s290, 8
      %p292 = scmp.lt.s32.totalorder %s19, 1
      %s293 = scalar_select %p292, %s19, 1
      %p294 = scmp.lt.s32.totalorder %s291, 8
      %s295 = scalar_select %p294, %s291, 8
      %s296 = smul.addr %s295, 2
      %s297 = smul.addr %s293, 18
      %s298 = sadd.s32 %s296, %s297
      %s299 = smul.addr %s298, 8
      %s300 = scalar_lea.vmem %s1, %s299
      %s301 = sadd.s32 %s20, 1
      %s302 = smul.u32 %s301, 8
      %s303 = smul.u32 8, %s20
      %p304 = scmp.lt.s32.totalorder %s19, 1
      %s305 = scalar_select %p304, %s19, 1
      %p306 = scmp.lt.s32.totalorder %s303, 7
      %s307 = scalar_select %p306, %s303, 7
      %s308 = smul.addr %s305, 8
      %s309 = sadd.s32 %s307, %s308
      %s310 = smul.addr %s309, 8
      %s311 = scalar_lea.vmem %s4, %s310
      %s312 = smul.u32 8, %s20
      %v313 = vld [vmem:[%s283] sm:$0xff]
      %v314 = vld [vmem:[%s283 + $0x8] sm:$0x1]
      %v315 = vld [vmem:[%s283 + $0x10] sm:$0xff]
      %v316 = vld [vmem:[%s283 + $0x18] sm:$0x1]
      %v317 = vld [vmem:[%s283 + $0x20] sm:$0xff]
      %v318 = vld [vmem:[%s283 + $0x28] sm:$0x1]
      %v319 = vld [vmem:[%s283 + $0x30] sm:$0xff]
      %v320 = vld [vmem:[%s283 + $0x38] sm:$0x1]
      %v321 = vld [vmem:[%s283 + $0x40] sm:$0xff]
      %v322 = vld [vmem:[%s283 + $0x48] sm:$0x1]
      %v323 = vld [vmem:[%s283 + $0x50] sm:$0xff]
      %v324 = vld [vmem:[%s283 + $0x58] sm:$0x1]
      %v325 = vld [vmem:[%s283 + $0x60] sm:$0xff]
      %v326 = vld [vmem:[%s283 + $0x68] sm:$0x1]
      %v327 = vld [vmem:[%s283 + $0x70] sm:$0xff]
      %v328 = vld [vmem:[%s283 + $0x78] sm:$0x1]
      %v329 = vld [vmem:[%s300] sm:$0xff]
      %v330 = vld [vmem:[%s300 + $0x8] sm:$0x1]
      %v331 = vld [vmem:[%s3] sm:$0x1]
      %v333 = vlaneseq
      %v334 = vshrl.u32 %v333, 7
      %v335 = vsub.s32 0, %v334
      %v336 = vrot.slane %v331, %v335
      %vm354 = vcmask 1046528
      %v355 = vrot.slane %v313, 1
      %v356 = vrot.slane %v314, 1
      %v357 = vsel %vm354, %v355, %v356
      %v358 = vrot.slane %v315, 1
      %v359 = vrot.slane %v316, 1
      %v360 = vsel %vm354, %v358, %v359
      %v361 = vrot.slane %v317, 1
      %v362 = vrot.slane %v318, 1
      %v363 = vsel %vm354, %v361, %v362
      %v364 = vrot.slane %v319, 1
      %v365 = vrot.slane %v320, 1
      %v366 = vsel %vm354, %v364, %v365
      %v367 = vrot.slane %v321, 1
      %v368 = vrot.slane %v322, 1
      %v369 = vsel %vm354, %v367, %v368
      %v370 = vrot.slane %v323, 1
      %v371 = vrot.slane %v324, 1
      %v372 = vsel %vm354, %v370, %v371
      %v373 = vrot.slane %v325, 1
      %v374 = vrot.slane %v326, 1
      %v375 = vsel %vm354, %v373, %v374
      %v376 = vrot.slane %v327, 1
      %v377 = vrot.slane %v328, 1
      %v378 = vsel %vm354, %v376, %v377
      %v379 = vld [vmem:[%s2] sm:$0xff]
      %v380 = vld [vmem:[%s2 + $0x8] sm:$0xff]
      %s381 = scalar_lea.vmem %s2, 16
      %v382 = vld [vmem:[%s381] sm:$0xff]
      %v383 = vld [vmem:[%s381 + $0x8] sm:$0xff]
      %vm384 = vcmask 130048
      %v385 = vsel %vm384, %v357, 0
      %v387 = vsel %vm384, %v360, 0
      %v389 = vsel %vm384, %v363, 0
      %v391 = vsel %vm384, %v366, 0
      %v393 = vsel %vm384, %v369, 0
      %v395 = vsel %vm384, %v372, 0
      %v397 = vsel %vm384, %v375, 0
      %v399 = vsel %vm384, %v378, 0
      %401 = vmatprep.subr.mxu0 0.0
      %402 = vmatpush1.msra.mxu0 %v382
      %403 = vmatprep.subr.mxu0 0.0
      %404 = vmatpush1.msra.mxu0 %v383
      %405 = vmatprep.subr.mxu0 0.0
      %406 = vmatpush1.msra.mxu0 0.0
      %407 = vmatprep.subr.mxu0 0.0
      %408 = vmatpush1.msra.mxu0 0.0
      %409 = vmatprep.subr.mxu0 0.0
      %410 = vmatpush1.msra.mxu0 0.0
      %411 = vmatprep.subr.mxu0 0.0
      %412 = vmatpush1.msra.mxu0 0.0
      %413 = vmatprep.subr.mxu0 0.0
      %414 = vmatpush1.msra.mxu0 0.0
      %415 = vmatprep.subr.mxu0 0.0
      %416 = vmatpush1.msra.mxu0 0.0
      %417 = vmatprep.subr.mxu0 0.0
      %418 = vmatpush1.msra.mxu0 0.0
      %419 = vmatprep.subr.mxu0 0.0
      %420 = vmatpush1.msra.mxu0 0.0
      %421 = vmatprep.subr.mxu0 0.0
      %422 = vmatpush1.msra.mxu0 0.0
      %423 = vmatprep.subr.mxu0 0.0
      %424 = vmatpush1.msra.mxu0 0.0
      %425 = vmatprep.subr.mxu0 0.0
      %426 = vmatpush1.msra.mxu0 0.0
      %427 = vmatprep.subr.mxu0 0.0
      %428 = vmatpush1.msra.mxu0 0.0
      %429 = vmatprep.subr.mxu0 0.0
      %430 = vmatpush1.msra.mxu0 0.0
      %431 = vmatprep.subr.mxu0 0.0
      %432 = vmatpush1.msra.mxu0 0.0
      %433 = vmatprep.subr.mxu0 0.0
      %434 = vmatpush1.msra.mxu0 0.0
      %435 = vmatprep.subr.mxu0 0.0
      %436 = vmatpush1.msra.mxu0 0.0
      %437 = vmatprep.subr.mxu0 0.0
      %438 = vmatpush1.msra.mxu0 0.0
      %439 = vmatprep.subr.mxu0 0.0
      %440 = vmatpush1.msra.mxu0 0.0
      %441 = vmatprep.subr.mxu0 0.0
      %442 = vmatpush1.msra.mxu0 0.0
      %443 = vmatprep.subr.mxu0 0.0
      %444 = vmatpush1.msra.mxu0 0.0
      %445 = vmatprep.subr.mxu0 0.0
      %446 = vmatpush1.msra.mxu0 0.0
      %447 = vmatprep.subr.mxu0 0.0
      %448 = vmatpush1.msra.mxu0 0.0
      %449 = vmatprep.subr.mxu0 0.0
      %450 = vmatpush1.msra.mxu0 0.0
      %451 = vmatprep.subr.mxu0 0.0
      %452 = vmatpush1.msra.mxu0 0.0
      %453 = vmatprep.subr.mxu0 0.0
      %454 = vmatpush1.msra.mxu0 0.0
      %455 = vmatprep.subr.mxu0 0.0
      %456 = vmatpush1.msra.mxu0 0.0
      %457 = vmatprep.subr.mxu0 0.0
      %458 = vmatpush1.msra.mxu0 0.0
      %459 = vmatprep.subr.mxu0 0.0
      %460 = vmatpush1.msra.mxu0 0.0
      %461 = vmatprep.subr.mxu0 0.0
      %462 = vmatpush1.msra.mxu0 0.0
      %463 = vmatprep.subr.mxu0 0.0
      %464 = vmatpush1.msra.mxu0 0.0
      %465 = vmatprep.mubr.f32.mxu0 0.0
      %466 = vmatmul.mubr.f32.gmra.mrb[0].mxu0 %v385
      %v467 = vpop.f32.mrb[0].mxu0
      %v468 = vadd.f32 0.0, %v467
      %v469 = vpop.f32.mrb[0].mxu0
      %470 = vmatprep.mubr.f32.mxu0 0.0
      %471 = vmatmul.mubr.f32.gmra.mrb[0].mxu0 %v387
      %v472 = vpop.f32.mrb[0].mxu0
      %v473 = vadd.f32 0.0, %v472
      %v474 = vpop.f32.mrb[0].mxu0
      %475 = vmatprep.mubr.f32.mxu0 0.0
      %476 = vmatmul.mubr.f32.gmra.mrb[0].mxu0 %v389
      %v477 = vpop.f32.mrb[0].mxu0
      %v478 = vadd.f32 0.0, %v477
      %v479 = vpop.f32.mrb[0].mxu0
      %480 = vmatprep.mubr.f32.mxu0 0.0
      %481 = vmatmul.mubr.f32.gmra.mrb[0].mxu0 %v391
      %v482 = vpop.f32.mrb[0].mxu0
      %v483 = vadd.f32 0.0, %v482
      %v484 = vpop.f32.mrb[0].mxu0
      %485 = vmatprep.mubr.f32.mxu0 0.0
      %486 = vmatmul.mubr.f32.gmra.mrb[0].mxu0 %v393
      %v487 = vpop.f32.mrb[0].mxu0
      %v488 = vadd.f32 0.0, %v487
      %v489 = vpop.f32.mrb[0].mxu0
      %490 = vmatprep.mubr.f32.mxu0 0.0
      %491 = vmatmul.mubr.f32.gmra.mrb[0].mxu0 %v395
      %v492 = vpop.f32.mrb[0].mxu0
      %v493 = vadd.f32 0.0, %v492
      %v494 = vpop.f32.mrb[0].mxu0
      %495 = vmatprep.mubr.f32.mxu0 0.0
      %496 = vmatmul.mubr.f32.gmra.mrb[0].mxu0 %v397
      %v497 = vpop.f32.mrb[0].mxu0
      %v498 = vadd.f32 0.0, %v497
      %v499 = vpop.f32.mrb[0].mxu0
      %500 = vmatprep.mubr.f32.mxu0 0.0
      %501 = vmatmul.mubr.f32.gmra.mrb[0].mxu0 %v399
      %v502 = vpop.f32.mrb[0].mxu0
      %v503 = vadd.f32 0.0, %v502
      %v504 = vpop.f32.mrb[0].mxu0
      %505 = vdwg.mxu0
      %v506 = vsel %vm384, %v313, 0
      %v508 = vsel %vm384, %v315, 0
      %v510 = vsel %vm384, %v317, 0
      %v512 = vsel %vm384, %v319, 0
      %v514 = vsel %vm384, %v321, 0
      %v516 = vsel %vm384, %v323, 0
      %v518 = vsel %vm384, %v325, 0
      %v520 = vsel %vm384, %v327, 0
      %522 = vmatprep.subr.mxu0 0.0
      %523 = vmatpush1.msra.mxu0 %v379
      %524 = vmatprep.subr.mxu0 0.0
      %525 = vmatpush1.msra.mxu0 %v380
      %526 = vmatprep.subr.mxu0 0.0
      %527 = vmatpush1.msra.mxu0 0.0
      %528 = vmatprep.subr.mxu0 0.0
      %529 = vmatpush1.msra.mxu0 0.0
      %530 = vmatprep.subr.mxu0 0.0
      %531 = vmatpush1.msra.mxu0 0.0
      %532 = vmatprep.subr.mxu0 0.0
      %533 = vmatpush1.msra.mxu0 0.0
      %534 = vmatprep.subr.mxu0 0.0
      %535 = vmatpush1.msra.mxu0 0.0
      %536 = vmatprep.subr.mxu0 0.0
      %537 = vmatpush1.msra.mxu0 0.0
      %538 = vmatprep.subr.mxu0 0.0
      %539 = vmatpush1.msra.mxu0 0.0
      %540 = vmatprep.subr.mxu0 0.0
      %541 = vmatpush1.msra.mxu0 0.0
      %542 = vmatprep.subr.mxu0 0.0
      %543 = vmatpush1.msra.mxu0 0.0
      %544 = vmatprep.subr.mxu0 0.0
      %545 = vmatpush1.msra.mxu0 0.0
      %546 = vmatprep.subr.mxu0 0.0
      %547 = vmatpush1.msra.mxu0 0.0
      %548 = vmatprep.subr.mxu0 0.0
      %549 = vmatpush1.msra.mxu0 0.0
      %550 = vmatprep.subr.mxu0 0.0
      %551 = vmatpush1.msra.mxu0 0.0
      %552 = vmatprep.subr.mxu0 0.0
      %553 = vmatpush1.msra.mxu0 0.0
      %554 = vmatprep.subr.mxu0 0.0
      %555 = vmatpush1.msra.mxu0 0.0
      %556 = vmatprep.subr.mxu0 0.0
      %557 = vmatpush1.msra.mxu0 0.0
      %558 = vmatprep.subr.mxu0 0.0
      %559 = vmatpush1.msra.mxu0 0.0
      %560 = vmatprep.subr.mxu0 0.0
      %561 = vmatpush1.msra.mxu0 0.0
      %562 = vmatprep.subr.mxu0 0.0
      %563 = vmatpush1.msra.mxu0 0.0
      %564 = vmatprep.subr.mxu0 0.0
      %565 = vmatpush1.msra.mxu0 0.0
      %566 = vmatprep.subr.mxu0 0.0
      %567 = vmatpush1.msra.mxu0 0.0
      %568 = vmatprep.subr.mxu0 0.0
      %569 = vmatpush1.msra.mxu0 0.0
      %570 = vmatprep.subr.mxu0 0.0
      %571 = vmatpush1.msra.mxu0 0.0
      %572 = vmatprep.subr.mxu0 0.0
      %573 = vmatpush1.msra.mxu0 0.0
      %574 = vmatprep.subr.mxu0 0.0
      %575 = vmatpush1.msra.mxu0 0.0
      %576 = vmatprep.subr.mxu0 0.0
      %577 = vmatpush1.msra.mxu0 0.0
      %578 = vmatprep.subr.mxu0 0.0
      %579 = vmatpush1.msra.mxu0 0.0
      %580 = vmatprep.subr.mxu0 0.0
      %581 = vmatpush1.msra.mxu0 0.0
      %582 = vmatprep.subr.mxu0 0.0
      %583 = vmatpush1.msra.mxu0 0.0
      %584 = vmatprep.subr.mxu0 0.0
      %585 = vmatpush1.msra.mxu0 0.0
      %586 = vmatprep.mubr.f32.mxu0 0.0
      %587 = vmatmul.mubr.f32.gmra.mrb[0].mxu0 %v506
      %v588 = vpop.f32.mrb[0].mxu0
      %v589 = vadd.f32 %v468, %v588
      %v590 = vpop.f32.mrb[0].mxu0
      %591 = vmatprep.mubr.f32.mxu0 0.0
      %592 = vmatmul.mubr.f32.gmra.mrb[0].mxu0 %v508
      %v593 = vpop.f32.mrb[0].mxu0
      %v594 = vadd.f32 %v473, %v593
      %v595 = vpop.f32.mrb[0].mxu0
      %596 = vmatprep.mubr.f32.mxu0 0.0
      %597 = vmatmul.mubr.f32.gmra.mrb[0].mxu0 %v510
      %v598 = vpop.f32.mrb[0].mxu0
      %v599 = vadd.f32 %v478, %v598
      %v600 = vpop.f32.mrb[0].mxu0
      %601 = vmatprep.mubr.f32.mxu0 0.0
      %602 = vmatmul.mubr.f32.gmra.mrb[0].mxu0 %v512
      %v603 = vpop.f32.mrb[0].mxu0
      %v604 = vadd.f32 %v483, %v603
      %v605 = vpop.f32.mrb[0].mxu0
      %606 = vmatprep.mubr.f32.mxu0 0.0
      %607 = vmatmul.mubr.f32.gmra.mrb[0].mxu0 %v514
      %v608 = vpop.f32.mrb[0].mxu0
      %v609 = vadd.f32 %v488, %v608
      %v610 = vpop.f32.mrb[0].mxu0
      %611 = vmatprep.mubr.f32.mxu0 0.0
      %612 = vmatmul.mubr.f32.gmra.mrb[0].mxu0 %v516
      %v613 = vpop.f32.mrb[0].mxu0
      %v614 = vadd.f32 %v493, %v613
      %v615 = vpop.f32.mrb[0].mxu0
      %616 = vmatprep.mubr.f32.mxu0 0.0
      %617 = vmatmul.mubr.f32.gmra.mrb[0].mxu0 %v518
      %v618 = vpop.f32.mrb[0].mxu0
      %v619 = vadd.f32 %v498, %v618
      %v620 = vpop.f32.mrb[0].mxu0
      %621 = vmatprep.mubr.f32.mxu0 0.0
      %622 = vmatmul.mubr.f32.gmra.mrb[0].mxu0 %v520
      %v623 = vpop.f32.mrb[0].mxu0
      %v624 = vadd.f32 %v503, %v623
      %v625 = vpop.f32.mrb[0].mxu0
      %626 = vdwg.mxu0
      %v627 = vadd.f32 %v336, %v589
      %v628 = vadd.f32 %v336, %v594
      %v629 = vadd.f32 %v336, %v599
      %v630 = vadd.f32 %v336, %v604
      %v631 = vadd.f32 %v336, %v609
      %v632 = vadd.f32 %v336, %v614
      %v633 = vadd.f32 %v336, %v619
      %v634 = vadd.f32 %v336, %v624
      %s635 = scalar_lea.vmem %s2, 32
      %v636 = vld [vmem:[%s635] sm:$0xff]
      %v637 = vld [vmem:[%s635 + $0x8] sm:$0xff]
      %s638 = scalar_lea.vmem %s2, 48
      %v639 = vld [vmem:[%s638] sm:$0xff]
      %v640 = vld [vmem:[%s638 + $0x8] sm:$0xff]
      %v643 = vrot.slane %v329, 1
      %v644 = vrot.slane %v330, 1
      %v645 = vsel %vm354, %v643, %v644
      %v646 = vsel %vm384, %v645, 0
      %648 = vmatprep.subr.mxu0 0.0
      %649 = vmatpush1.msra.mxu0 %v639
      %650 = vmatprep.subr.mxu0 0.0
      %651 = vmatpush1.msra.mxu0 %v640
      %652 = vmatprep.subr.mxu0 0.0
      %653 = vmatpush1.msra.mxu0 0.0
      %654 = vmatprep.subr.mxu0 0.0
      %655 = vmatpush1.msra.mxu0 0.0
      %656 = vmatprep.subr.mxu0 0.0
      %657 = vmatpush1.msra.mxu0 0.0
      %658 = vmatprep.subr.mxu0 0.0
      %659 = vmatpush1.msra.mxu0 0.0
      %660 = vmatprep.subr.mxu0 0.0
      %661 = vmatpush1.msra.mxu0 0.0
      %662 = vmatprep.subr.mxu0 0.0
      %663 = vmatpush1.msra.mxu0 0.0
      %664 = vmatprep.subr.mxu0 0.0
      %665 = vmatpush1.msra.mxu0 0.0
      %666 = vmatprep.subr.mxu0 0.0
      %667 = vmatpush1.msra.mxu0 0.0
      %668 = vmatprep.subr.mxu0 0.0
      %669 = vmatpush1.msra.mxu0 0.0
      %670 = vmatprep.subr.mxu0 0.0
      %671 = vmatpush1.msra.mxu0 0.0
      %672 = vmatprep.subr.mxu0 0.0
      %673 = vmatpush1.msra.mxu0 0.0
      %674 = vmatprep.subr.mxu0 0.0
      %675 = vmatpush1.msra.mxu0 0.0
      %676 = vmatprep.subr.mxu0 0.0
      %677 = vmatpush1.msra.mxu0 0.0
      %678 = vmatprep.subr.mxu0 0.0
      %679 = vmatpush1.msra.mxu0 0.0
      %680 = vmatprep.subr.mxu0 0.0
      %681 = vmatpush1.msra.mxu0 0.0
      %682 = vmatprep.subr.mxu0 0.0
      %683 = vmatpush1.msra.mxu0 0.0
      %684 = vmatprep.subr.mxu0 0.0
      %685 = vmatpush1.msra.mxu0 0.0
      %686 = vmatprep.subr.mxu0 0.0
      %687 = vmatpush1.msra.mxu0 0.0
      %688 = vmatprep.subr.mxu0 0.0
      %689 = vmatpush1.msra.mxu0 0.0
      %690 = vmatprep.subr.mxu0 0.0
      %691 = vmatpush1.msra.mxu0 0.0
      %692 = vmatprep.subr.mxu0 0.0
      %693 = vmatpush1.msra.mxu0 0.0
      %694 = vmatprep.subr.mxu0 0.0
      %695 = vmatpush1.msra.mxu0 0.0
      %696 = vmatprep.subr.mxu0 0.0
      %697 = vmatpush1.msra.mxu0 0.0
      %698 = vmatprep.subr.mxu0 0.0
      %699 = vmatpush1.msra.mxu0 0.0
      %700 = vmatprep.subr.mxu0 0.0
      %701 = vmatpush1.msra.mxu0 0.0
      %702 = vmatprep.subr.mxu0 0.0
      %703 = vmatpush1.msra.mxu0 0.0
      %704 = vmatprep.subr.mxu0 0.0
      %705 = vmatpush1.msra.mxu0 0.0
      %706 = vmatprep.subr.mxu0 0.0
      %707 = vmatpush1.msra.mxu0 0.0
      %708 = vmatprep.subr.mxu0 0.0
      %709 = vmatpush1.msra.mxu0 0.0
      %710 = vmatprep.subr.mxu0 0.0
      %711 = vmatpush1.msra.mxu0 0.0
      %712 = vmatprep.mubr.f32.mxu0 0.0
      %713 = vmatmul.mubr.f32.gmra.mrb[0].mxu0 %v646
      %v714 = vpop.f32.mrb[0].mxu0
      %v715 = vadd.f32 0.0, %v714
      %v716 = vpop.f32.mrb[0].mxu0
      %717 = vdwg.mxu0
      %v718 = vsel %vm384, %v329, 0
      %720 = vmatprep.subr.mxu0 0.0
      %721 = vmatpush1.msra.mxu0 %v636
      %722 = vmatprep.subr.mxu0 0.0
      %723 = vmatpush1.msra.mxu0 %v637
      %724 = vmatprep.subr.mxu0 0.0
      %725 = vmatpush1.msra.mxu0 0.0
      %726 = vmatprep.subr.mxu0 0.0
      %727 = vmatpush1.msra.mxu0 0.0
      %728 = vmatprep.subr.mxu0 0.0
      %729 = vmatpush1.msra.mxu0 0.0
      %730 = vmatprep.subr.mxu0 0.0
      %731 = vmatpush1.msra.mxu0 0.0
      %732 = vmatprep.subr.mxu0 0.0
      %733 = vmatpush1.msra.mxu0 0.0
      %734 = vmatprep.subr.mxu0 0.0
      %735 = vmatpush1.msra.mxu0 0.0
      %736 = vmatprep.subr.mxu0 0.0
      %737 = vmatpush1.msra.mxu0 0.0
      %738 = vmatprep.subr.mxu0 0.0
      %739 = vmatpush1.msra.mxu0 0.0
      %740 = vmatprep.subr.mxu0 0.0
      %741 = vmatpush1.msra.mxu0 0.0
      %742 = vmatprep.subr.mxu0 0.0
      %743 = vmatpush1.msra.mxu0 0.0
      %744 = vmatprep.subr.mxu0 0.0
      %745 = vmatpush1.msra.mxu0 0.0
      %746 = vmatprep.subr.mxu0 0.0
      %747 = vmatpush1.msra.mxu0 0.0
      %748 = vmatprep.subr.mxu0 0.0
      %749 = vmatpush1.msra.mxu0 0.0
      %750 = vmatprep.subr.mxu0 0.0
      %751 = vmatpush1.msra.mxu0 0.0
      %752 = vmatprep.subr.mxu0 0.0
      %753 = vmatpush1.msra.mxu0 0.0
      %754 = vmatprep.subr.mxu0 0.0
      %755 = vmatpush1.msra.mxu0 0.0
      %756 = vmatprep.subr.mxu0 0.0
      %757 = vmatpush1.msra.mxu0 0.0
      %758 = vmatprep.subr.mxu0 0.0
      %759 = vmatpush1.msra.mxu0 0.0
      %760 = vmatprep.subr.mxu0 0.0
      %761 = vmatpush1.msra.mxu0 0.0
      %762 = vmatprep.subr.mxu0 0.0
      %763 = vmatpush1.msra.mxu0 0.0
      %764 = vmatprep.subr.mxu0 0.0
      %765 = vmatpush1.msra.mxu0 0.0
      %766 = vmatprep.subr.mxu0 0.0
      %767 = vmatpush1.msra.mxu0 0.0
      %768 = vmatprep.subr.mxu0 0.0
      %769 = vmatpush1.msra.mxu0 0.0
      %770 = vmatprep.subr.mxu0 0.0
      %771 = vmatpush1.msra.mxu0 0.0
      %772 = vmatprep.subr.mxu0 0.0
      %773 = vmatpush1.msra.mxu0 0.0
      %774 = vmatprep.subr.mxu0 0.0
      %775 = vmatpush1.msra.mxu0 0.0
      %776 = vmatprep.subr.mxu0 0.0
      %777 = vmatpush1.msra.mxu0 0.0
      %778 = vmatprep.subr.mxu0 0.0
      %779 = vmatpush1.msra.mxu0 0.0
      %780 = vmatprep.subr.mxu0 0.0
      %781 = vmatpush1.msra.mxu0 0.0
      %782 = vmatprep.subr.mxu0 0.0
      %783 = vmatpush1.msra.mxu0 0.0
      %784 = vmatprep.mubr.f32.mxu0 0.0
      %785 = vmatmul.mubr.f32.gmra.mrb[0].mxu0 %v718
      %v786 = vpop.f32.mrb[0].mxu0
      %v787 = vadd.f32 %v715, %v786
      %v788 = vpop.f32.mrb[0].mxu0
      %789 = vdwg.mxu0
      %790 = vmatprep.subr.mxu0 0.0
      %791 = vmatpush1.msra.mxu0 %v639
      %792 = vmatprep.subr.mxu0 0.0
      %793 = vmatpush1.msra.mxu0 %v640
      %794 = vmatprep.subr.mxu0 0.0
      %795 = vmatpush1.msra.mxu0 0.0
      %796 = vmatprep.subr.mxu0 0.0
      %797 = vmatpush1.msra.mxu0 0.0
      %798 = vmatprep.subr.mxu0 0.0
      %799 = vmatpush1.msra.mxu0 0.0
      %800 = vmatprep.subr.mxu0 0.0
      %801 = vmatpush1.msra.mxu0 0.0
      %802 = vmatprep.subr.mxu0 0.0
      %803 = vmatpush1.msra.mxu0 0.0
      %804 = vmatprep.subr.mxu0 0.0
      %805 = vmatpush1.msra.mxu0 0.0
      %806 = vmatprep.subr.mxu0 0.0
      %807 = vmatpush1.msra.mxu0 0.0
      %808 = vmatprep.subr.mxu0 0.0
      %809 = vmatpush1.msra.mxu0 0.0
      %810 = vmatprep.subr.mxu0 0.0
      %811 = vmatpush1.msra.mxu0 0.0
      %812 = vmatprep.subr.mxu0 0.0
      %813 = vmatpush1.msra.mxu0 0.0
      %814 = vmatprep.subr.mxu0 0.0
      %815 = vmatpush1.msra.mxu0 0.0
      %816 = vmatprep.subr.mxu0 0.0
      %817 = vmatpush1.msra.mxu0 0.0
      %818 = vmatprep.subr.mxu0 0.0
      %819 = vmatpush1.msra.mxu0 0.0
      %820 = vmatprep.subr.mxu0 0.0
      %821 = vmatpush1.msra.mxu0 0.0
      %822 = vmatprep.subr.mxu0 0.0
      %823 = vmatpush1.msra.mxu0 0.0
      %824 = vmatprep.subr.mxu0 0.0
      %825 = vmatpush1.msra.mxu0 0.0
      %826 = vmatprep.subr.mxu0 0.0
      %827 = vmatpush1.msra.mxu0 0.0
      %828 = vmatprep.subr.mxu0 0.0
      %829 = vmatpush1.msra.mxu0 0.0
      %830 = vmatprep.subr.mxu0 0.0
      %831 = vmatpush1.msra.mxu0 0.0
      %832 = vmatprep.subr.mxu0 0.0
      %833 = vmatpush1.msra.mxu0 0.0
      %834 = vmatprep.subr.mxu0 0.0
      %835 = vmatpush1.msra.mxu0 0.0
      %836 = vmatprep.subr.mxu0 0.0
      %837 = vmatpush1.msra.mxu0 0.0
      %838 = vmatprep.subr.mxu0 0.0
      %839 = vmatpush1.msra.mxu0 0.0
      %840 = vmatprep.subr.mxu0 0.0
      %841 = vmatpush1.msra.mxu0 0.0
      %842 = vmatprep.subr.mxu0 0.0
      %843 = vmatpush1.msra.mxu0 0.0
      %844 = vmatprep.subr.mxu0 0.0
      %845 = vmatpush1.msra.mxu0 0.0
      %846 = vmatprep.subr.mxu0 0.0
      %847 = vmatpush1.msra.mxu0 0.0
      %848 = vmatprep.subr.mxu0 0.0
      %849 = vmatpush1.msra.mxu0 0.0
      %850 = vmatprep.subr.mxu0 0.0
      %851 = vmatpush1.msra.mxu0 0.0
      %852 = vmatprep.subr.mxu0 0.0
      %853 = vmatpush1.msra.mxu0 0.0
      %854 = vmatprep.mubr.f32.mxu0 0.0
      %855 = vmatmul.mubr.f32.gmra.mrb[0].mxu0 %v387
      %v856 = vpop.f32.mrb[0].mxu0
      %v857 = vadd.f32 0.0, %v856
      %v858 = vpop.f32.mrb[0].mxu0
      %859 = vmatprep.mubr.f32.mxu0 0.0
      %860 = vmatmul.mubr.f32.gmra.mrb[0].mxu0 %v389
      %v861 = vpop.f32.mrb[0].mxu0
      %v862 = vadd.f32 0.0, %v861
      %v863 = vpop.f32.mrb[0].mxu0
      %864 = vmatprep.mubr.f32.mxu0 0.0
      %865 = vmatmul.mubr.f32.gmra.mrb[0].mxu0 %v391
      %v866 = vpop.f32.mrb[0].mxu0
      %v867 = vadd.f32 0.0, %v866
      %v868 = vpop.f32.mrb[0].mxu0
      %869 = vmatprep.mubr.f32.mxu0 0.0
      %870 = vmatmul.mubr.f32.gmra.mrb[0].mxu0 %v393
      %v871 = vpop.f32.mrb[0].mxu0
      %v872 = vadd.f32 0.0, %v871
      %v873 = vpop.f32.mrb[0].mxu0
      %874 = vmatprep.mubr.f32.mxu0 0.0
      %875 = vmatmul.mubr.f32.gmra.mrb[0].mxu0 %v395
      %v876 = vpop.f32.mrb[0].mxu0
      %v877 = vadd.f32 0.0, %v876
      %v878 = vpop.f32.mrb[0].mxu0
      %879 = vmatprep.mubr.f32.mxu0 0.0
      %880 = vmatmul.mubr.f32.gmra.mrb[0].mxu0 %v397
      %v881 = vpop.f32.mrb[0].mxu0
      %v882 = vadd.f32 0.0, %v881
      %v883 = vpop.f32.mrb[0].mxu0
      %884 = vmatprep.mubr.f32.mxu0 0.0
      %885 = vmatmul.mubr.f32.gmra.mrb[0].mxu0 %v399
      %v886 = vpop.f32.mrb[0].mxu0
      %v887 = vadd.f32 0.0, %v886
      %v888 = vpop.f32.mrb[0].mxu0
      %889 = vdwg.mxu0
      %890 = vmatprep.subr.mxu0 0.0
      %891 = vmatpush1.msra.mxu0 %v636
      %892 = vmatprep.subr.mxu0 0.0
      %893 = vmatpush1.msra.mxu0 %v637
      %894 = vmatprep.subr.mxu0 0.0
      %895 = vmatpush1.msra.mxu0 0.0
      %896 = vmatprep.subr.mxu0 0.0
      %897 = vmatpush1.msra.mxu0 0.0
      %898 = vmatprep.subr.mxu0 0.0
      %899 = vmatpush1.msra.mxu0 0.0
      %900 = vmatprep.subr.mxu0 0.0
      %901 = vmatpush1.msra.mxu0 0.0
      %902 = vmatprep.subr.mxu0 0.0
      %903 = vmatpush1.msra.mxu0 0.0
      %904 = vmatprep.subr.mxu0 0.0
      %905 = vmatpush1.msra.mxu0 0.0
      %906 = vmatprep.subr.mxu0 0.0
      %907 = vmatpush1.msra.mxu0 0.0
      %908 = vmatprep.subr.mxu0 0.0
      %909 = vmatpush1.msra.mxu0 0.0
      %910 = vmatprep.subr.mxu0 0.0
      %911 = vmatpush1.msra.mxu0 0.0
      %912 = vmatprep.subr.mxu0 0.0
      %913 = vmatpush1.msra.mxu0 0.0
      %914 = vmatprep.subr.mxu0 0.0
      %915 = vmatpush1.msra.mxu0 0.0
      %916 = vmatprep.subr.mxu0 0.0
      %917 = vmatpush1.msra.mxu0 0.0
      %918 = vmatprep.subr.mxu0 0.0
      %919 = vmatpush1.msra.mxu0 0.0
      %920 = vmatprep.subr.mxu0 0.0
      %921 = vmatpush1.msra.mxu0 0.0
      %922 = vmatprep.subr.mxu0 0.0
      %923 = vmatpush1.msra.mxu0 0.0
      %924 = vmatprep.subr.mxu0 0.0
      %925 = vmatpush1.msra.mxu0 0.0
      %926 = vmatprep.subr.mxu0 0.0
      %927 = vmatpush1.msra.mxu0 0.0
      %928 = vmatprep.subr.mxu0 0.0
      %929 = vmatpush1.msra.mxu0 0.0
      %930 = vmatprep.subr.mxu0 0.0
      %931 = vmatpush1.msra.mxu0 0.0
      %932 = vmatprep.subr.mxu0 0.0
      %933 = vmatpush1.msra.mxu0 0.0
      %934 = vmatprep.subr.mxu0 0.0
      %935 = vmatpush1.msra.mxu0 0.0
      %936 = vmatprep.subr.mxu0 0.0
      %937 = vmatpush1.msra.mxu0 0.0
      %938 = vmatprep.subr.mxu0 0.0
      %939 = vmatpush1.msra.mxu0 0.0
      %940 = vmatprep.subr.mxu0 0.0
      %941 = vmatpush1.msra.mxu0 0.0
      %942 = vmatprep.subr.mxu0 0.0
      %943 = vmatpush1.msra.mxu0 0.0
      %944 = vmatprep.subr.mxu0 0.0
      %945 = vmatpush1.msra.mxu0 0.0
      %946 = vmatprep.subr.mxu0 0.0
      %947 = vmatpush1.msra.mxu0 0.0
      %948 = vmatprep.subr.mxu0 0.0
      %949 = vmatpush1.msra.mxu0 0.0
      %950 = vmatprep.subr.mxu0 0.0
      %951 = vmatpush1.msra.mxu0 0.0
      %952 = vmatprep.subr.mxu0 0.0
      %953 = vmatpush1.msra.mxu0 0.0
      %954 = vmatprep.mubr.f32.mxu0 0.0
      %955 = vmatmul.mubr.f32.gmra.mrb[0].mxu0 %v508
      %v956 = vpop.f32.mrb[0].mxu0
      %v957 = vadd.f32 %v857, %v956
      %v958 = vpop.f32.mrb[0].mxu0
      %959 = vmatprep.mubr.f32.mxu0 0.0
      %960 = vmatmul.mubr.f32.gmra.mrb[0].mxu0 %v510
      %v961 = vpop.f32.mrb[0].mxu0
      %v962 = vadd.f32 %v862, %v961
      %v963 = vpop.f32.mrb[0].mxu0
      %964 = vmatprep.mubr.f32.mxu0 0.0
      %965 = vmatmul.mubr.f32.gmra.mrb[0].mxu0 %v512
      %v966 = vpop.f32.mrb[0].mxu0
      %v967 = vadd.f32 %v867, %v966
      %v968 = vpop.f32.mrb[0].mxu0
      %969 = vmatprep.mubr.f32.mxu0 0.0
      %970 = vmatmul.mubr.f32.gmra.mrb[0].mxu0 %v514
      %v971 = vpop.f32.mrb[0].mxu0
      %v972 = vadd.f32 %v872, %v971
      %v973 = vpop.f32.mrb[0].mxu0
      %974 = vmatprep.mubr.f32.mxu0 0.0
      %975 = vmatmul.mubr.f32.gmra.mrb[0].mxu0 %v516
      %v976 = vpop.f32.mrb[0].mxu0
      %v977 = vadd.f32 %v877, %v976
      %v978 = vpop.f32.mrb[0].mxu0
      %979 = vmatprep.mubr.f32.mxu0 0.0
      %980 = vmatmul.mubr.f32.gmra.mrb[0].mxu0 %v518
      %v981 = vpop.f32.mrb[0].mxu0
      %v982 = vadd.f32 %v882, %v981
      %v983 = vpop.f32.mrb[0].mxu0
      %984 = vmatprep.mubr.f32.mxu0 0.0
      %985 = vmatmul.mubr.f32.gmra.mrb[0].mxu0 %v520
      %v986 = vpop.f32.mrb[0].mxu0
      %v987 = vadd.f32 %v887, %v986
      %v988 = vpop.f32.mrb[0].mxu0
      %989 = vdwg.mxu0
      %v990 = vadd.f32 %v627, %v957
      %v991 = vadd.f32 %v628, %v962
      %v992 = vadd.f32 %v629, %v967
      %v993 = vadd.f32 %v630, %v972
      %v994 = vadd.f32 %v631, %v977
      %v995 = vadd.f32 %v632, %v982
      %v996 = vadd.f32 %v633, %v987
      %vm997 = vcmask 64512
      %998 = vst.msk [vmem:[%s311] sm:$0xff] %vm997, %v990
      %999 = vst.msk [vmem:[%s311 + $0x8] sm:$0xff] %vm997, %v991
      %1000 = vst.msk [vmem:[%s311 + $0x10] sm:$0xff] %vm997, %v992
      %1001 = vst.msk [vmem:[%s311 + $0x18] sm:$0xff] %vm997, %v993
      %1002 = vst.msk [vmem:[%s311 + $0x20] sm:$0xff] %vm997, %v994
      %1003 = vst.msk [vmem:[%s311 + $0x28] sm:$0xff] %vm997, %v995
      %1004 = vst.msk [vmem:[%s311 + $0x30] sm:$0xff] %vm997, %v996
      %v1005 = vadd.f32 %v634, %v787
      %1006 = vst.msk [vmem:[%s311 + $0x38] sm:$0xff] %vm997, %v1005
      %s1007 = smul.u32 8, %s20
      %p1008 = scmp.lt.s32.totalorder %s19, 1
      %s1009 = scalar_select %p1008, %s19, 1
      %p1010 = scmp.lt.s32.totalorder %s1007, 7
      %s1011 = scalar_select %p1010, %s1007, 7
      %s1012 = smul.addr %s1009, 8
      %s1013 = sadd.s32 %s1011, %s1012
      %s1014 = smul.addr %s1013, 8
      %s1015 = scalar_lea.vmem %s4, %s1014
      // Predicated region
      $region37: #{_downsample_impl.1} parent=35 // pred_check
        %p1016 = pneg %p149
      $region38: #{_downsample_impl.1} parent=35 // pred_check_branch
        %1018 = sbr.rel (%p1016) target = $region40
      $region39: #{_downsample_impl.1} parent=35 // pred_region
        %s1019 = smul.u32 8, %s20
      $region40: #{_downsample_impl.1} parent=35 // pred_fallthru
        _
    $region36: #{_downsample_impl.1} parent=5 // pred_fallthru
      _
    %p1020 = scmp.le.s32.totalorder 2, %s10
    // Predicated region
    $region41: #{_downsample_impl.1} parent=5 // pred_check
      %p1021 = pneg %p1020
    $region42: #{_downsample_impl.1} parent=5 // pred_check_branch
      %1023 = sbr.rel (%p1021) target = $region44
    $region43: #{_downsample_impl.1} parent=5 // pred_region
      %s1024 = ssub.s32 %s10, 2
      // Predicated region
      $region45: #{_downsample_impl.1} parent=43 // pred_check
        %p1025 = pneg %p155
      $region46: #{_downsample_impl.1} parent=43 // pred_check_branch
        %1027 = sbr.rel (%p1025) target = $region48
      $region47: #{_downsample_impl.1} parent=43 // pred_region
        %s1028 = smul.u32 8, %s22
        %p1029 = scmp.lt.s32.totalorder %s21, 1
        %s1030 = scalar_select %p1029, %s21, 1
        %p1031 = scmp.lt.s32.totalorder %s1028, 7
        %s1032 = scalar_select %p1031, %s1028, 7
        %s1033 = smul.addr %s1030, 8
        %s1034 = sadd.s32 %s1032, %s1033
        %s1035 = smul.addr %s1034, 8
        %s1036 = scalar_lea.vmem %s4, %s1035
      $region48: #{_downsample_impl.1} parent=43 // pred_fallthru
        _
    $region44: #{_downsample_impl.1} parent=5 // pred_fallthru
      _
  $region6: #{_downsample_impl.1} parent=0 // loop_footer
    %s14 = sadd.s32 1, %s10
  $region7: #{_downsample_impl.1} parent=0 // loop_footer_branch
    %9 = sbr.rel target = $region3
  $region8: #{_downsample_impl.1} parent=0 // loop_exit
    _

</llo_original>
